<compile_context>
chip_gen: v5e
topology: v5e:2x2
jax: 0.10.0
libtpu: 0.0.40
codegen_flags: <defaults>
</compile_context>

<pallas_src>
import jax
import jax.numpy as jnp
from jax.experimental import pallas as pl
from jax.experimental.pallas import tpu as pltpu


def _bridge_bidir_kernel(x_ref, o_ref):
    """Fused strided-gather + concat + ReLU, one full-tile pass.

    x_ref : (L, 2, TB, E)  -- [:, 0] = forward-dir hidden, [:, 1] = backward
    o_ref : (L, TB, 2E)
    """
    x = x_ref[...]                                   # one full-tile load
    fwd = jnp.maximum(x[:, 0], 0.0)                  # (L, TB, E)
    bwd = jnp.maximum(x[:, 1], 0.0)                  # (L, TB, E)
    o_ref[...] = jnp.concatenate([fwd, bwd], axis=-1)  # one full-tile store


def _relu_kernel(x_ref, o_ref):
    """Unidirectional path: plain full-tile ReLU on a lane-dense 2D slab."""
    o_ref[...] = jnp.maximum(x_ref[...], 0.0)


def _pick_row_tile(bytes_per_row, n_rows, budget_bytes=4 << 20):
    """Largest row tile whose input block stays under `budget_bytes`;
    a multiple of 8 (sublane tiling) whenever tiling is actually needed."""
    t = max(1, budget_bytes // max(bytes_per_row, 1))
    if t >= n_rows:
        return n_rows
    return min(n_rows, max(8, (t // 8) * 8))


class BridgeLayer:
    """JAX/Pallas port of the PyTorch BridgeLayer."""

    def __init__(self, enc_hidden_size, dec_hidden_size, key=None):
        self.input_size = enc_hidden_size
        self.output_size = dec_hidden_size
        if key is None:
            key = jax.random.PRNGKey(0)
        kw, kb = jax.random.split(key)
        # nn.Linear(E, D): weight (D, E), bias (D) -- declared but unused in
        # forward(); kept only for parameter-shape parity with the reference.
        bound = 1.0 / jnp.sqrt(jnp.float32(enc_hidden_size))
        self.proj_weight = jax.random.uniform(
            kw, (dec_hidden_size, enc_hidden_size), jnp.float32, -bound, bound)
        self.proj_bias = jax.random.uniform(
            kb, (dec_hidden_size,), jnp.float32, -bound, bound)

    # ---- bidirectional path: gather-pairs + concat + ReLU in one pass ----
    def _forward_bidirectional(self, x):
        l2, b, e = x.shape
        assert l2 % 2 == 0, "bidirectional encoder needs even leading dim"
        n_layers = l2 // 2
        x4 = x.reshape(n_layers, 2, b, e)            # free (contiguous) reshape
        itemsize = x.dtype.itemsize
        tb = _pick_row_tile(n_layers * 2 * e * itemsize, b)
        grid = (pl.cdiv(b, tb),)                     # (1,) at demo sizes
        return pl.pallas_call(
            _bridge_bidir_kernel,
            out_shape=jax.ShapeDtypeStruct((n_layers, b, 2 * e), x.dtype),
            grid=grid,
            in_specs=[pl.BlockSpec((n_layers, 2, tb, e),
                                   lambda i: (0, 0, i, 0))],
            out_specs=pl.BlockSpec((n_layers, tb, 2 * e),
                                   lambda i: (0, i, 0)),
            compiler_params=pltpu.CompilerParams(
                dimension_semantics=("parallel",)),
        )(x4)

    # ---- unidirectional path: pure ReLU, rows folded onto sublanes ----
    def _forward_unidirectional(self, x):
        l2, b, e = x.shape
        rows = l2 * b
        x2 = x.reshape(rows, e)                      # free (contiguous) reshape
        itemsize = x.dtype.itemsize
        tr = _pick_row_tile(e * itemsize, rows)
        out = pl.pallas_call(
            _relu_kernel,
            out_shape=jax.ShapeDtypeStruct((rows, e), x.dtype),
            grid=(pl.cdiv(rows, tr),),
            in_specs=[pl.BlockSpec((tr, e), lambda i: (i, 0))],
            out_specs=pl.BlockSpec((tr, e), lambda i: (i, 0)),
            compiler_params=pltpu.CompilerParams(
                dimension_semantics=("parallel",)),
        )(x2)
        return out.reshape(l2, b, e)

    def __call__(self, enc_final_hidden, enc_cell_type='GRU',
                 bidirectional_encoder=True):
        if enc_cell_type == 'LSTM':
            # LSTM final state is a (h, c) tuple; take h (glue, not hot path).
            enc_final_hidden = enc_final_hidden[0]
        x = jnp.asarray(enc_final_hidden)
        if bidirectional_encoder:
            return self._forward_bidirectional(x)
        return self._forward_unidirectional(x)


def _reference_forward(x, bidirectional_encoder=True):
    """Pure-JAX reference mirroring the PyTorch forward, for verification."""
    if bidirectional_encoder:
        l2 = x.shape[0]
        x = jnp.concatenate([x[0:l2:2], x[1:l2:2]], axis=2)
    return jnp.maximum(x, 0.0)


if __name__ == "__main__":
    key = jax.random.PRNGKey(0)
    k_param, k_input = jax.random.split(key)

    num_layers = 2          # GRU layers
    batch = 2
    enc_hidden = 32         # E
    dec_hidden = 32         # D (proj layer shape only; unused in forward)

    bridge = BridgeLayer(enc_hidden, dec_hidden, key=k_param)

    # GRU bidirectional final hidden: (num_layers * 2, batch, enc_hidden)
    enc_final_hidden = jax.random.normal(
        k_input, (num_layers * 2, batch, enc_hidden), dtype=jnp.float32)

    # Bidirectional (default) path.
    out = bridge(enc_final_hidden, enc_cell_type='GRU',
                 bidirectional_encoder=True)
    out = jax.block_until_ready(out)
    ref = _reference_forward(enc_final_hidden, bidirectional_encoder=True)
    assert out.shape == (num_layers, batch, 2 * enc_hidden), out.shape
    assert jnp.allclose(out, ref, atol=1e-6), "bidir mismatch vs reference"

    # Unidirectional path (pure ReLU).
    out_uni = bridge(enc_final_hidden, enc_cell_type='GRU',
                     bidirectional_encoder=False)
    out_uni = jax.block_until_ready(out_uni)
    ref_uni = _reference_forward(enc_final_hidden, bidirectional_encoder=False)
    assert out_uni.shape == enc_final_hidden.shape, out_uni.shape
    assert jnp.allclose(out_uni, ref_uni, atol=1e-6), "unidir mismatch"

    print("KERNEL_OK")
</pallas_src>

<mosaic_0001>
module attributes {stable_mosaic.version = 11 : i64} {
  func.func @_bridge_bidir_kernel(%arg0: i32, %arg1: memref<2x2x2x32xf32, #tpu.memory_space<vmem>>, %arg2: memref<2x2x64xf32, #tpu.memory_space<vmem>>) attributes {dimension_semantics = [#tpu.dimension_semantics<parallel>], iteration_bounds = array<i64: 1>, scalar_prefetch = 0 : i64, scratch_operands = 0 : i64, tpu.core_type = #tpu.core_type<tc>, window_params = [{transform_indices = @transform_0, window_bounds = array<i64: 2, 2, 2, 32>}, {transform_indices = @transform_1, window_bounds = array<i64: 2, 2, 64>}]} {
    %c0 = arith.constant 0 : index
    %c0_0 = arith.constant 0 : index
    %c0_1 = arith.constant 0 : index
    %c0_2 = arith.constant 0 : index
    %0 = vector.load %arg1[%c0, %c0_0, %c0_1, %c0_2] : memref<2x2x2x32xf32, #tpu.memory_space<vmem>>, vector<2x2x2x32xf32>
    %1 = vector.extract_strided_slice %0 {offsets = [0, 0, 0, 0], sizes = [2, 1, 2, 32], strides = [1, 1, 1, 1]} : vector<2x2x2x32xf32> to vector<2x1x2x32xf32>
    %2 = vector.shape_cast %1 : vector<2x1x2x32xf32> to vector<2x2x32xf32>
    %cst = arith.constant 0.000000e+00 : f32
    %3 = vector.broadcast %cst : f32 to vector<2x2x32xf32>
    %4 = arith.maximumf %2, %3 : vector<2x2x32xf32>
    %5 = vector.extract_strided_slice %0 {offsets = [0, 1, 0, 0], sizes = [2, 1, 2, 32], strides = [1, 1, 1, 1]} : vector<2x2x2x32xf32> to vector<2x1x2x32xf32>
    %6 = vector.shape_cast %5 : vector<2x1x2x32xf32> to vector<2x2x32xf32>
    %cst_3 = arith.constant 0.000000e+00 : f32
    %7 = vector.broadcast %cst_3 : f32 to vector<2x2x32xf32>
    %8 = arith.maximumf %6, %7 : vector<2x2x32xf32>
    %9 = tpu.concatenate %4, %8 in 2 : vector<2x2x32xf32>, vector<2x2x32xf32> -> vector<2x2x64xf32>
    %c0_4 = arith.constant 0 : index
    %c0_5 = arith.constant 0 : index
    %c0_6 = arith.constant 0 : index
    %10 = vector.load %arg2[%c0_4, %c0_5, %c0_6] : memref<2x2x64xf32, #tpu.memory_space<vmem>>, vector<2x2x64xf32>
    tpu.vector_store %arg2[%c0_4, %c0_5, %c0_6], %9 {strides = array<i32>} : memref<2x2x64xf32, #tpu.memory_space<vmem>>, vector<2x2x64xf32>,
    return
  }
  func.func @transform_0(%arg0: i32) -> (i32, i32, i32, i32) {
    %c0_i32 = arith.constant 0 : i32
    %c0_i32_0 = arith.constant 0 : i32
    %c0_i32_1 = arith.constant 0 : i32
    %c0_i32_2 = arith.constant 0 : i32
    return %c0_i32, %c0_i32_0, %arg0, %c0_i32_1 : i32, i32, i32, i32
  }
  func.func @transform_1(%arg0: i32) -> (i32, i32, i32) {
    %c0_i32 = arith.constant 0 : i32
    %c0_i32_0 = arith.constant 0 : i32
    %c0_i32_1 = arith.constant 0 : i32
    return %c0_i32, %arg0, %c0_i32_0 : i32, i32, i32
  }
}

</mosaic_0001>

<llo_original>
// kernel: tpu_custom_call.1
$region0: #{tpu_custom_call.1}
  #allocation0 [shape = 'u32[]', space=smem, size = 0x4, offset = 0x4, fixed_abs, tag = 'smem constant byte address 0x4 - core index']
  #allocation1 [shape = 'u32[72,128]{1,0:T(1,128)}', space=vmem, size = 0x9000, scoped, tag = 'internal scratch']
  %s0 = inlined_call_operand.hbm [shape: f32[2,2,2,32], index: 0, kind: input, shape index: {}]
  %s1 = inlined_call_operand.hbm [shape: f32[2,2,64], index: 1, kind: output, shape index: {}]
  %s2 = sld [smem:[#allocation0]]
  $region18: #{tpu_custom_call.1} parent=0
    _
  %s4 = ssub.s32 1, %s2
  %s5 = scalar_select 0, %s4, %s2
  $region1: #{tpu_custom_call.1} parent=0
    #allocation2 [shape = 'u8[4096]{0}', space=vmem, size = 0x1000, scoped, tag = 'input window, operand 0, single buffered']
    #allocation3 [shape = 's32[1]{0}', space=sflag, size = 0x4, scoped, tag = 'scoped memory for tpu_custom_call.1']
    #allocation4 [shape = 's32[1]{0}', space=sflag, size = 0x4, scoped, tag = 'scoped memory for tpu_custom_call.1']
    #allocation5 [shape = 'u8[2048]{0}', space=vmem, size = 0x800, scoped, tag = 'output window, operand 0, single buffered']
    %6 = vsyncpa [#allocation3], 0
    %7 = vsyncpa [#allocation4], 0
    // Predicated region
    $region2: #{tpu_custom_call.1} parent=1 // pred_check
      _
    $region3: #{tpu_custom_call.1} parent=1 // pred_check_branch
      %9 = sbr.rel (0) target = $region5
    $region4: #{tpu_custom_call.1} parent=1 // pred_region
      %11 = vsyncadd [#allocation3], 0
      %s12 = sshll.u32 %s0, 4
      %s13 = int_to_ptr.hbm [resolvable:$true] %s12
      %s14 = sshll.u32 [#allocation2], 4
      %s15 = int_to_ptr.vmem [resolvable:$true] %s14
      %20 = dma.hbm_to_vmem [thread:$0]  %s13, 128, %s15, [#allocation3], 32, 32, 2
    $region5: #{tpu_custom_call.1} parent=1 // pred_fallthru
      _
    // Predicated region
    $region6: #{tpu_custom_call.1} parent=1 // pred_check
      _
    $region7: #{tpu_custom_call.1} parent=1 // pred_check_branch
      %22 = sbr.rel (0) target = $region9
    $region8: #{tpu_custom_call.1} parent=1 // pred_region
      %24 = dma.done [#allocation3], 128
    $region9: #{tpu_custom_call.1} parent=1 // pred_fallthru
      _
    %v25 = vld [vmem:[#allocation2] sm:$0x3]
    %v26 = vld [vmem:[#allocation2 + $0x2] sm:$0x3]
    %v27 = vld [vmem:[#allocation2 + $0x4] sm:$0x3]
    %v28 = vld [vmem:[#allocation2 + $0x6] sm:$0x3]
    %v29 = vmax.f32 %v25, 0.0
    %v30 = vmax.f32 %v27, 0.0
    %v31 = vmax.f32 %v26, 0.0
    %v32 = vmax.f32 %v28, 0.0
    %35 = vrot.lane.b32.xlu0 %v31, 32
    %v36 = vpop.permute.xlu0 %35
    %37 = vrot.lane.b32.xlu0 %v32, 32
    %v38 = vpop.permute.xlu0 %37
    %vm41 = vcmask 261120
    %v42 = vsel %vm41, %v29, %v36
    %v43 = vsel %vm41, %v30, %v38
    %vm44 = vcmask 517120
    %45 = vst.msk [vmem:[#allocation5] sm:$0x3] %vm44, %v42
    %46 = vst.msk [vmem:[#allocation5 + $0x2] sm:$0x3] %vm44, %v43
    // Predicated region
    $region10: #{tpu_custom_call.1} parent=1 // pred_check
      _
    $region11: #{tpu_custom_call.1} parent=1 // pred_check_branch
      %48 = sbr.rel (0) target = $region13
    $region12: #{tpu_custom_call.1} parent=1 // pred_region
      %50 = vsyncadd [#allocation4], 0
      %s51 = sshll.u32 [#allocation5], 4
      %s52 = int_to_ptr.vmem [resolvable:$true] %s51
      %s53 = sshll.u32 %s1, 4
      %s54 = int_to_ptr.hbm [resolvable:$true] %s53
      %59 = dma.vmem_to_hbm [thread:$0]  %s52, 64, %s54, [#allocation4], 32, 32, 2
    $region13: #{tpu_custom_call.1} parent=1 // pred_fallthru
      _
    // Predicated region
    $region14: #{tpu_custom_call.1} parent=1 // pred_check
      _
    $region15: #{tpu_custom_call.1} parent=1 // pred_check_branch
      %61 = sbr.rel (0) target = $region17
    $region16: #{tpu_custom_call.1} parent=1 // pred_region
      %63 = dma.done [#allocation4], 64
    $region17: #{tpu_custom_call.1} parent=1 // pred_fallthru
      _
    %64 = vsyncpa [#allocation3], 1
    %65 = vsyncpa [#allocation4], 1

</llo_original>
